<compile_context>
chip_gen: v5e
topology: v5e:2x2
jax: 0.10.0
libtpu: 0.0.40
codegen_flags: <defaults>
</compile_context>

<pallas_src>
import functools

import numpy as np

import jax
import jax.numpy as jnp
from jax.experimental import pallas as pl
from jax.experimental.pallas import tpu as pltpu

_LANES = 128
_MIN_BLOCK_ROWS = 8
_MAX_BLOCK_ROWS = 1024  # 512 KiB f32 per input block


def _cdiv(a, b):
    return -(-a // b)


def _common_float_dtype(arrays):
    dt = functools.reduce(jnp.promote_types, [a.dtype for a in arrays])
    if not jnp.issubdtype(dt, jnp.floating):
        dt = jnp.float32
    return dt


def _choose_block_rows(sizes):
    """Biggest useful tile: capped at _MAX_BLOCK_ROWS, never larger than the
    largest tensor (blocks never span tensors), multiple of 8 sublanes."""
    max_rows = max(_cdiv(int(n), _LANES) for n in sizes)
    rows = min(_MAX_BLOCK_ROWS, max_rows)
    rows = max(_MIN_BLOCK_ROWS, _cdiv(rows, 8) * 8)
    return rows


def _build_stream(flat_arrays, block_elems, pad_value, dtype):
    """Concatenate flattened tensors, each padded up to a block boundary.

    The pad + concat is a single fused XLA producer pass (the price of fusing
    ~20 pallas launches into one); pad values contribute 0 to the losses.
    """
    parts = []
    for f in flat_arrays:
        n = f.size
        pad = _cdiv(n, block_elems) * block_elems - n
        f = f.reshape(-1).astype(dtype)
        if pad:
            f = jnp.pad(f, (0, pad), constant_values=pad_value)
        parts.append(f)
    stream = parts[0] if len(parts) == 1 else jnp.concatenate(parts)
    return stream.reshape(-1, _LANES)


# ---------------------------------------------------------------------------
# Pallas kernels
# ---------------------------------------------------------------------------
def _adv_sum_kernel(n_ref, x_ref, o_ref, acc_ref):
    """adv_loss = sum over tensors of mean((1 - x)^2), fused over all blocks.

    n_ref[i] = element count of the tensor owning block i (scalar prefetch).
    Accumulates (1/N) * (1-x)^2 into a full-tile VMEM accumulator (VALU only);
    reduces to a scalar and writes SMEM output only on the last grid step.
    """
    i = pl.program_id(0)

    @pl.when(i == 0)
    def _():
        acc_ref[...] = jnp.zeros_like(acc_ref)

    d = jnp.float32(1.0) - x_ref[...].astype(jnp.float32)
    inv_n = jnp.float32(1.0) / n_ref[i].astype(jnp.float32)
    acc_ref[...] += inv_n * d * d

    @pl.when(i == pl.num_programs(0) - 1)
    def _():
        o_ref[0, 0] = jnp.sum(acc_ref[...])


def _l1_pair_kernel(cat_ref, n_ref, a_ref, b_ref, o_ref, acc_mel_ref,
                    acc_fm_ref):
    """Fused L1: mel pair (category 0) + all feature-map pairs (category 1).

    cat_ref[i] / n_ref[i] are per-block scalar-prefetch metadata. Each block's
    |a-b| is scaled by 1/N of its tensor and routed into the mel or fm VMEM
    accumulator. Final cross-lane reduction happens once, on the last step.
    """
    i = pl.program_id(0)

    @pl.when(i == 0)
    def _():
        acc_mel_ref[...] = jnp.zeros_like(acc_mel_ref)
        acc_fm_ref[...] = jnp.zeros_like(acc_fm_ref)

    v = jnp.abs(a_ref[...].astype(jnp.float32) - b_ref[...].astype(jnp.float32))
    inv_n = jnp.float32(1.0) / n_ref[i].astype(jnp.float32)
    is_mel = cat_ref[i] == 0
    w_mel = jnp.where(is_mel, inv_n, jnp.float32(0.0))
    w_fm = jnp.where(is_mel, jnp.float32(0.0), inv_n)
    acc_mel_ref[...] += w_mel * v
    acc_fm_ref[...] += w_fm * v

    @pl.when(i == pl.num_programs(0) - 1)
    def _():
        o_ref[0, 0] = jnp.sum(acc_mel_ref[...])
        o_ref[0, 1] = jnp.sum(acc_fm_ref[...])


# ---------------------------------------------------------------------------
# Fused wrappers
# ---------------------------------------------------------------------------
def _fused_adv_loss(d_outs):
    """sum_d mean((1 - d_out)^2), one pallas_call for all discriminator outs."""
    sizes = [int(x.size) for x in d_outs]
    block_rows = _choose_block_rows(sizes)
    block_elems = block_rows * _LANES
    dtype = _common_float_dtype(d_outs)
    # Pad with 1.0 so padded elements contribute (1-1)^2 = 0.
    x_stream = _build_stream(d_outs, block_elems, 1.0, dtype)

    n_per_block = []
    for n in sizes:
        n_per_block += [n] * _cdiv(n, block_elems)
    n_arr = jnp.asarray(np.asarray(n_per_block, dtype=np.int32))
    num_blocks = len(n_per_block)

    out = pl.pallas_call(
        _adv_sum_kernel,
        out_shape=jax.ShapeDtypeStruct((1, 1), jnp.float32),
        grid_spec=pltpu.PrefetchScalarGridSpec(
            num_scalar_prefetch=1,
            grid=(num_blocks,),
            in_specs=[pl.BlockSpec((block_rows, _LANES), lambda i, n: (i, 0))],
            out_specs=pl.BlockSpec(
                (1, 1), lambda i, n: (0, 0), memory_space=pltpu.SMEM
            ),
            scratch_shapes=[pltpu.VMEM((block_rows, _LANES), jnp.float32)],
        ),
        compiler_params=pltpu.CompilerParams(
            dimension_semantics=("arbitrary",)
        ),
    )(n_arr, x_stream)
    return out[0, 0]


def _fused_l1_loss(mel_pair, fm_pairs):
    """Returns (mel_loss, feature_loss) from one fused pallas_call."""
    pairs = [mel_pair] + list(fm_pairs)
    for a, b in pairs:
        assert a.size == b.size, "L1 operands must have matching element count"
    sizes = [int(a.size) for a, _ in pairs]
    block_rows = _choose_block_rows(sizes)
    block_elems = block_rows * _LANES
    dtype = _common_float_dtype([t for p in pairs for t in p])
    # Pad both sides with 0 so padded elements contribute |0-0| = 0.
    a_stream = _build_stream([a for a, _ in pairs], block_elems, 0.0, dtype)
    b_stream = _build_stream([b for _, b in pairs], block_elems, 0.0, dtype)

    cat, ns = [], []
    for t, n in enumerate(sizes):
        nb = _cdiv(n, block_elems)
        cat += [0 if t == 0 else 1] * nb
        ns += [n] * nb
    cat_arr = jnp.asarray(np.asarray(cat, dtype=np.int32))
    n_arr = jnp.asarray(np.asarray(ns, dtype=np.int32))
    num_blocks = len(ns)

    out = pl.pallas_call(
        _l1_pair_kernel,
        out_shape=jax.ShapeDtypeStruct((1, 2), jnp.float32),
        grid_spec=pltpu.PrefetchScalarGridSpec(
            num_scalar_prefetch=2,
            grid=(num_blocks,),
            in_specs=[
                pl.BlockSpec((block_rows, _LANES), lambda i, c, n: (i, 0)),
                pl.BlockSpec((block_rows, _LANES), lambda i, c, n: (i, 0)),
            ],
            out_specs=pl.BlockSpec(
                (1, 2), lambda i, c, n: (0, 0), memory_space=pltpu.SMEM
            ),
            scratch_shapes=[
                pltpu.VMEM((block_rows, _LANES), jnp.float32),
                pltpu.VMEM((block_rows, _LANES), jnp.float32),
            ],
        ),
        compiler_params=pltpu.CompilerParams(
            dimension_semantics=("arbitrary",)
        ),
    )(cat_arr, n_arr, a_stream, b_stream)
    return out[0, 0], out[0, 1]


# ---------------------------------------------------------------------------
# GeneratorLoss forward
# ---------------------------------------------------------------------------
def generator_loss(
    gen_discriminator_out,
    target_mel,
    gen_mel,
    real_feature_map,
    gen_feature_map,
    *,
    mel_lambda,
    fm_lambda,
):
    if len(gen_discriminator_out):
        adv_loss = _fused_adv_loss(list(gen_discriminator_out))
    else:
        adv_loss = jnp.float32(0.0)

    fm_pairs = [
        (r, g)
        for real, gen in zip(real_feature_map, gen_feature_map)
        for r, g in zip(real, gen)
    ]
    mel_loss, feature_loss = _fused_l1_loss((target_mel, gen_mel), fm_pairs)

    return {
        "generator_loss": adv_loss
        + mel_lambda * mel_loss
        + fm_lambda * feature_loss,
        "adv_loss": adv_loss,
        "mel_loss": mel_loss,
        "feature_loss": feature_loss,
    }


# ---------------------------------------------------------------------------
# Pure-JAX reference for a sanity check
# ---------------------------------------------------------------------------
def generator_loss_ref(gdo, tm, gm, rfm, gfm, *, mel_lambda, fm_lambda):
    adv = sum(jnp.mean((1.0 - d.astype(jnp.float32)) ** 2) for d in gdo)
    mel = jnp.mean(jnp.abs(tm.astype(jnp.float32) - gm.astype(jnp.float32)))
    fm = jnp.float32(0.0)
    for real, gen in zip(rfm, gfm):
        for r, g in zip(real, gen):
            fm = fm + jnp.mean(
                jnp.abs(r.astype(jnp.float32) - g.astype(jnp.float32))
            )
    return {
        "generator_loss": adv + mel_lambda * mel + fm_lambda * fm,
        "adv_loss": adv,
        "mel_loss": mel,
        "feature_loss": fm,
    }


if __name__ == "__main__":
    MEL_LAMBDA = 45.0
    FM_LAMBDA = 2.0

    key = jax.random.PRNGKey(0)
    keys = jax.random.split(key, 12)

    B = 2
    gen_discriminator_out = [
        jax.random.normal(keys[0], (B, 1, 16), jnp.float32),
        jax.random.normal(keys[1], (B, 1, 8), jnp.float32),
    ]
    target_mel = jax.random.normal(keys[2], (B, 8, 16), jnp.float32)
    gen_mel = jax.random.normal(keys[3], (B, 8, 16), jnp.float32)
    real_feature_map = [
        [
            jax.random.normal(keys[4], (B, 4, 16), jnp.float32),
            jax.random.normal(keys[5], (B, 8, 8), jnp.float32),
        ],
        [
            jax.random.normal(keys[6], (B, 4, 4, 8), jnp.float32),
            jax.random.normal(keys[7], (B, 8, 2, 8), jnp.float32),
        ],
    ]
    gen_feature_map = [
        [
            jax.random.normal(keys[8], (B, 4, 16), jnp.float32),
            jax.random.normal(keys[9], (B, 8, 8), jnp.float32),
        ],
        [
            jax.random.normal(keys[10], (B, 4, 4, 8), jnp.float32),
            jax.random.normal(keys[11], (B, 8, 2, 8), jnp.float32),
        ],
    ]

    out = generator_loss(
        gen_discriminator_out,
        target_mel,
        gen_mel,
        real_feature_map,
        gen_feature_map,
        mel_lambda=MEL_LAMBDA,
        fm_lambda=FM_LAMBDA,
    )
    out = jax.tree_util.tree_map(jax.block_until_ready, out)

    ref = generator_loss_ref(
        gen_discriminator_out,
        target_mel,
        gen_mel,
        real_feature_map,
        gen_feature_map,
        mel_lambda=MEL_LAMBDA,
        fm_lambda=FM_LAMBDA,
    )

    for k in out:
        assert jnp.allclose(out[k], ref[k], rtol=1e-5, atol=1e-5), (
            k,
            out[k],
            ref[k],
        )

    print("KERNEL_OK")
</pallas_src>

<mosaic_0001>
module attributes {stable_mosaic.version = 11 : i64} {
  func.func @_adv_sum_kernel(%arg0: i32, %arg1: memref<2xi32, #tpu.memory_space<smem>>, %arg2: memref<8x128xf32, #tpu.memory_space<vmem>>, %arg3: memref<1x1xf32, #tpu.memory_space<smem>>, %arg4: memref<8x128xf32, #tpu.memory_space<vmem>>) attributes {dimension_semantics = [#tpu.dimension_semantics<arbitrary>], iteration_bounds = array<i64: 2>, scalar_prefetch = 1 : i64, scratch_operands = 1 : i64, tpu.core_type = #tpu.core_type<tc>, window_params = [{transform_indices = @transform_0, window_bounds = array<i64: 8, 128>}, {transform_indices = @transform_1, window_bounds = array<i64: 1, 1>}]} {
    %c0_i32 = arith.constant 0 : i32
    %0 = arith.cmpi eq, %arg0, %c0_i32 : i32
    %1 = arith.extui %0 : i1 to i32
    %c0_i32_0 = arith.constant 0 : i32
    %2 = arith.cmpi ne, %1, %c0_i32_0 : i32
    scf.if %2 {
      %cst_8 = arith.constant 0.000000e+00 : f32
      %19 = vector.broadcast %cst_8 : f32 to vector<8x128xf32>
      %c0_9 = arith.constant 0 : index
      %c0_10 = arith.constant 0 : index
      %20 = vector.load %arg4[%c0_9, %c0_10] : memref<8x128xf32, #tpu.memory_space<vmem>>, vector<8x128xf32>
      tpu.vector_store %arg4[%c0_9, %c0_10], %19 {strides = array<i32>} : memref<8x128xf32, #tpu.memory_space<vmem>>, vector<8x128xf32>,
    } else {
    }
    %c0 = arith.constant 0 : index
    %c0_1 = arith.constant 0 : index
    %3 = vector.load %arg2[%c0, %c0_1] : memref<8x128xf32, #tpu.memory_space<vmem>>, vector<8x128xf32>
    %cst = arith.constant 1.000000e+00 : f32
    %4 = vector.broadcast %cst : f32 to vector<8x128xf32>
    %5 = arith.subf %4, %3 : vector<8x128xf32>
    %6 = arith.index_cast %arg0 : i32 to index
    %7 = memref.load %arg1[%6] : memref<2xi32, #tpu.memory_space<smem>>
    %8 = arith.sitofp %7 : i32 to f32
    %cst_2 = arith.constant 1.000000e+00 : f32
    %9 = arith.divf %cst_2, %8 : f32
    %c0_3 = arith.constant 0 : index
    %c0_4 = arith.constant 0 : index
    %10 = vector.load %arg4[%c0_3, %c0_4] : memref<8x128xf32, #tpu.memory_space<vmem>>, vector<8x128xf32>
    %11 = vector.broadcast %9 : f32 to vector<8x128xf32>
    %12 = arith.mulf %11, %5 : vector<8x128xf32>
    %13 = arith.mulf %12, %5 : vector<8x128xf32>
    %14 = arith.addf %10, %13 : vector<8x128xf32>
    %c0_5 = arith.constant 0 : index
    %c0_6 = arith.constant 0 : index
    %15 = vector.load %arg4[%c0_5, %c0_6] : memref<8x128xf32, #tpu.memory_space<vmem>>, vector<8x128xf32>
    tpu.vector_store %arg4[%c0_5, %c0_6], %14 {strides = array<i32>} : memref<8x128xf32, #tpu.memory_space<vmem>>, vector<8x128xf32>,
    %c1_i32 = arith.constant 1 : i32
    %16 = arith.cmpi eq, %arg0, %c1_i32 : i32
    %17 = arith.extui %16 : i1 to i32
    %c0_i32_7 = arith.constant 0 : i32
    %18 = arith.cmpi ne, %17, %c0_i32_7 : i32
    scf.if %18 {
      %c0_8 = arith.constant 0 : index
      %c0_9 = arith.constant 0 : index
      %19 = vector.load %arg4[%c0_8, %c0_9] : memref<8x128xf32, #tpu.memory_space<vmem>>, vector<8x128xf32>
      %20 = vector.shape_cast %19 : vector<8x128xf32> to vector<1x8x128xf32>
      %cst_10 = arith.constant dense<0.000000e+00> : vector<1xf32>
      %21 = vector.multi_reduction <add>, %20, %cst_10 [1, 2] : vector<1x8x128xf32> to vector<1xf32>
      %22 = vector.shape_cast %21 : vector<1xf32> to vector<1x1x1xf32>
      %23 = vector.extract %22[0, 0, 0] : f32 from vector<1x1x1xf32>
      %c0_11 = arith.constant 0 : index
      %c0_12 = arith.constant 0 : index
      %24 = memref.load %arg3[%c0_11, %c0_12] : memref<1x1xf32, #tpu.memory_space<smem>>
      memref.store %23, %arg3[%c0_11, %c0_12] : memref<1x1xf32, #tpu.memory_space<smem>>
    } else {
    }
    return
  }
  func.func @transform_0(%arg0: i32, %arg1: memref<2xi32, #tpu.memory_space<smem>>) -> (i32, i32) {
    %c0_i32 = arith.constant 0 : i32
    %c0_i32_0 = arith.constant 0 : i32
    return %arg0, %c0_i32 : i32, i32
  }
  func.func @transform_1(%arg0: i32, %arg1: memref<2xi32, #tpu.memory_space<smem>>) -> (i32, i32) {
    %c0_i32 = arith.constant 0 : i32
    %c0_i32_0 = arith.constant 0 : i32
    %c0_i32_1 = arith.constant 0 : i32
    return %c0_i32, %c0_i32_0 : i32, i32
  }
}

</mosaic_0001>

<llo_original>
// kernel: tpu_custom_call.1
$region0: #{tpu_custom_call.1}
  #allocation0 [shape = 'u32[]', space=smem, size = 0x4, offset = 0x4, fixed_abs, tag = 'smem constant byte address 0x4 - core index']
  #allocation1 [shape = 'u32[72,128]{1,0:T(1,128)}', space=vmem, size = 0x9000, scoped, tag = 'internal scratch']
  #allocation2 [shape = 'f32[8,128]{1,0:T(8,128)}', space=vmem, size = 0x1000, scoped, tag = 'scratch operand']
  #allocation3 [shape = 's32[1]{0}', space=sflag, size = 0x4, scoped, tag = 'scoped memory for tpu_custom_call.1']
  #allocation4 [shape = 'u8[512]{0}', space=smem, size = 0x200, scoped, tag = 'prefetched SMEM operand 0']
  %s0 = inlined_call_operand.hbm [shape: s32[2], index: 0, kind: input, shape index: {}]
  %s1 = inlined_call_operand.hbm [shape: f32[16,128], index: 1, kind: input, shape index: {}]
  %s2 = inlined_call_operand.hbm [shape: f32[1,1], index: 2, kind: output, shape index: {}]
  %s3 = sld [smem:[#allocation0]]
  $region49: #{tpu_custom_call.1} parent=0
    _
  %s5 = ssub.s32 1, %s3
  %s6 = scalar_select 0, %s5, %s3
  %s8 = sshll.u32 %s0, 4
  %s9 = int_to_ptr.hbm [resolvable:$true] %s8
  %11 = dma.hbm_to_smem %s9, 16, [#allocation4], [#allocation3]
  %13 = dma.done [#allocation3], 16
  %14 = sfence
  $region1: #{tpu_custom_call.1} parent=0
    #allocation5 [shape = 'u8[8192]{0}', space=vmem, size = 0x2000, scoped, tag = 'input window, operand 1']
    #allocation6 [shape = 's32[2]{0}', space=sflag, size = 0x8, scoped, tag = 'scoped memory for tpu_custom_call.1']
    #allocation7 [shape = 's32[2]{0}', space=sflag, size = 0x8, scoped, tag = 'scoped memory for tpu_custom_call.1']
    #allocation8 [shape = 'u8[512]{0}', space=smem, size = 0x200, scoped, tag = 'output window, operand 0, single buffered']
    %15 = vsyncpa [#allocation6], 0
    %s16 = scalar_lea.sflag [#allocation6], 1
    %17 = vsyncpa %s16, 0
    %18 = vsyncpa [#allocation7], 0
    loop: start=0, step=1, limit=4
    $region2: #{tpu_custom_call.1} parent=1 // loop_pre_header
      _
    $region3: #{tpu_custom_call.1} parent=1 // loop_header
      %s20 = sphi 0, %s24
      %p21 = scmp.ge.s32.totalorder %s20, 4
      %s30 = sphi 0, %s32
      %s33 = sphi 0, %s30
      %s34 = sphi 0, %s33
      %s50 = sphi 0, %s34
      %s54 = sphi 0, %s54
      %s56 = sphi 0, %s54
      %s57 = sphi 0, %s56
      %s71 = sphi 0, %s57
    $region4: #{tpu_custom_call.1} parent=1 // loop_header_branch
      %23 = sbr.rel (%p21) target = $region8
    $region5: #{tpu_custom_call.1} parent=1 // loop_body
      %s25 = ssub.s32 %s20, 1
      %s26 = ssub.s32 %s20, 2
      %s27 = sadd.s32 %s20, 1
      %s28 = ssub.s32 %s20, %s27
      %p29 = scmp.eq.s32.totalorder %s28, 0
      %s31 = sadd.s32 %s30, 1
      %s32 = scalar_select %p29, %s30, %s31
      %p35 = pneg %p29
      %p36 = scmp.eq.s32.totalorder %s20, 1
      %p37 = por %p35, %p36
      %p38 = scmp.ne.s32.totalorder %s30, %s33
      %p39 = scmp.eq.s32.totalorder %s20, 0
      %p40 = por %p38, %p39
      %p41 = scmp.ne.s32.totalorder %s30, %s33
      %p42 = scmp.eq.s32.totalorder %s25, 1
      %p43 = por %p41, %p42
      %p44 = scmp.ne.s32.totalorder %s33, %s34
      %p45 = scmp.eq.s32.totalorder %s25, 0
      %p46 = por %p44, %p45
      %p47 = scmp.ne.s32.totalorder %s33, %s34
      %p48 = scmp.eq.s32.totalorder %s26, 1
      %p49 = por %p47, %p48
      %p51 = scmp.ne.s32.totalorder %s34, %s50
      %p52 = scmp.eq.s32.totalorder %s26, 0
      %p53 = por %p51, %p52
      %s55 = sadd.s32 %s54, 1
      %p58 = scmp.eq.s32.totalorder %s20, 1
      %p59 = scmp.ne.s32.totalorder %s54, %s56
      %p60 = scmp.eq.s32.totalorder %s20, 0
      %p61 = por %p59, %p60
      %p62 = scmp.ne.s32.totalorder %s54, %s56
      %p63 = scmp.eq.s32.totalorder %s25, 1
      %p64 = por %p62, %p63
      %p65 = scmp.ne.s32.totalorder %s56, %s57
      %p66 = scmp.eq.s32.totalorder %s25, 0
      %p67 = por %p65, %p66
      %p68 = scmp.ne.s32.totalorder %s56, %s57
      %p69 = scmp.eq.s32.totalorder %s26, 1
      %p70 = por %p68, %p69
      %p72 = scmp.ne.s32.totalorder %s57, %s71
      %p73 = scmp.eq.s32.totalorder %s26, 0
      %p74 = por %p72, %p73
      %p75 = scmp.le.s32.totalorder 1, %s20
      %p76 = scmp.lt.s32.totalorder %s20, 3
      %p77 = pnand %p75, %p76
      %p78 = pneg %p77
      // Predicated region
      $region9: #{tpu_custom_call.1} parent=5 // pred_check
        _
      $region10: #{tpu_custom_call.1} parent=5 // pred_check_branch
        %80 = sbr.rel (%p77) target = $region12
      $region11: #{tpu_custom_call.1} parent=5 // pred_region
        %s81 = ssub.s32 %s20, 1
      $region12: #{tpu_custom_call.1} parent=5 // pred_fallthru
        _
      %p82 = scmp.lt.s32.totalorder %s20, 2
      // Predicated region
      $region13: #{tpu_custom_call.1} parent=5 // pred_check
        %p83 = pneg %p82
      $region14: #{tpu_custom_call.1} parent=5 // pred_check_branch
        %85 = sbr.rel (%p83) target = $region16
      $region15: #{tpu_custom_call.1} parent=5 // pred_region
        // Predicated region
        $region17: #{tpu_custom_call.1} parent=15 // pred_check
          %p86 = pneg %p40
        $region18: #{tpu_custom_call.1} parent=15 // pred_check_branch
          %88 = sbr.rel (%p86) target = $region20
        $region19: #{tpu_custom_call.1} parent=15 // pred_region
          %s89 = sand.u32 %s30, 1
          %s90 = scalar_lea.sflag [#allocation6], %s89
          %s91 = sand.u32 %s30, 1
          %s92 = smul.addr %s91, 8
          %s93 = scalar_lea.vmem [#allocation5], %s92
          %95 = vsyncadd %s90, 0
          %s96 = smul.addr %s20, 8
          %s97 = scalar_lea.hbm %s1, %s96
          %s99 = sshll.u32 %s97, 4
          %s100 = int_to_ptr.hbm [resolvable:$true] %s99
          %s101 = sshll.u32 %s93, 4
          %s102 = int_to_ptr.vmem [resolvable:$true] %s101
          %104 = dma.hbm_to_vmem [thread:$0]  %s100, 128, %s102, %s90
        $region20: #{tpu_custom_call.1} parent=15 // pred_fallthru
          _
      $region16: #{tpu_custom_call.1} parent=5 // pred_fallthru
        _
      %p105 = scmp.le.s32.totalorder 1, %s20
      %p106 = scmp.lt.s32.totalorder %s20, 3
      %p107 = pnand %p105, %p106
      %p108 = pneg %p107
      // Predicated region
      $region21: #{tpu_custom_call.1} parent=5 // pred_check
        _
      $region22: #{tpu_custom_call.1} parent=5 // pred_check_branch
        %110 = sbr.rel (%p107) target = $region24
      $region23: #{tpu_custom_call.1} parent=5 // pred_region
        %s111 = ssub.s32 %s20, 1
        %s112 = sand.u32 %s33, 1
        %s113 = scalar_lea.sflag [#allocation6], %s112
        %s114 = sand.u32 %s33, 1
        %s115 = smul.addr %s114, 8
        %s116 = scalar_lea.vmem [#allocation5], %s115
        // Predicated region
        $region25: #{tpu_custom_call.1} parent=23 // pred_check
          %p117 = pneg %p46
        $region26: #{tpu_custom_call.1} parent=23 // pred_check_branch
          %119 = sbr.rel (%p117) target = $region28
        $region27: #{tpu_custom_call.1} parent=23 // pred_region
          %121 = dma.done %s113, 128
        $region28: #{tpu_custom_call.1} parent=23 // pred_fallthru
          _
        %s122 = sand.u32 %s33, 1
        %s123 = scalar_lea.sflag [#allocation6], %s122
        %s124 = sand.u32 %s33, 1
        %s125 = smul.addr %s124, 8
        %s126 = scalar_lea.vmem [#allocation5], %s125
        %p127 = pneg %p46
        %p128 = pneg %p43
        %p129 = pneg %p67
        %p130 = pneg %p64
        %p131 = scmp.eq.s32.totalorder %s25, 0
        // Predicated region
        $region29: #{tpu_custom_call.1} parent=23 // pred_check
          %p132 = pneg %p131
        $region30: #{tpu_custom_call.1} parent=23 // pred_check_branch
          %134 = sbr.rel (%p132) target = $region32
        $region31: #{tpu_custom_call.1} parent=23 // pred_region
          %135 = vst [vmem:[#allocation2] sm:$0xff] 0.0
        $region32: #{tpu_custom_call.1} parent=23 // pred_fallthru
          _
        %v136 = vld [vmem:[%s116] sm:$0xff]
        %v137 = vsub.f32 1.0, %v136
        %s138 = sld [smem:[#allocation4 + %s25]]
        %s139 = scvt.s32.f32 %s138
        %v140 = vstv %s139
        %v141 = vrcp.pop %v140
        %v142 = vmul.f32 %v140, %v141
        %v143 = vsub.f32 1.0, %v142
        %v144 = vmul.f32 %v141, %v143
        %v145 = vadd.f32 %v141, %v144
        %vm146 = vweird.f32 %v140
        %vm147 = vweird.f32 %v141
        %vm148 = vmor %vm146, %vm147
        %v149 = vsel %vm148, %v141, %v145
        %v150 = vand.u32 2147483647, %v140
        %vm151 = vcmp.eq.f32.partialorder %v150, 8.507059e+37
        %v152 = vand.u32 %v140, 2147483648
        %v153 = vor.u32 1.1754944e-38, %v152
        %v154 = vsel %vm151, %v153, %v149
        %s155 = vtos %v154
        %v156 = vld [vmem:[#allocation2] sm:$0xff]
        %v157 = vstv %s155
        %v158 = vmul.f32 %v157, %v137
        %v159 = vmul.f32 %v158, %v137
        %v160 = vadd.f32 %v156, %v159
        %161 = vst [vmem:[#allocation2] sm:$0xff] %v160
        %p162 = scmp.eq.s32.totalorder %s25, 1
        // Predicated region
        $region33: #{tpu_custom_call.1} parent=23 // pred_check
          %p163 = pneg %p162
        $region34: #{tpu_custom_call.1} parent=23 // pred_check_branch
          %165 = sbr.rel (%p163) target = $region36
        $region35: #{tpu_custom_call.1} parent=23 // pred_region
          %v166 = vld [vmem:[#allocation2] sm:$0xff]
          %167 = vadd.xlane.f32.xlu0 %v166
          %v168 = vpop.xlane.xlu0 %167
          %v169 = vrot.slane %v168, 4
          %v170 = vadd.f32 %v168, %v169
          %v171 = vrot.slane %v170, 2
          %v172 = vadd.f32 %v170, %v171
          %v173 = vrot.slane %v172, 1
          %v174 = vadd.f32 %v172, %v173
          %s175 = vtos %v174
          %s176 = scalar_lea.smem [#allocation8], 0
          %177 = sst [smem:[%s176]] %s175
        $region36: #{tpu_custom_call.1} parent=23 // pred_fallthru
          _
        // Predicated region
        $region37: #{tpu_custom_call.1} parent=23 // pred_check
          %p178 = pneg %p64
        $region38: #{tpu_custom_call.1} parent=23 // pred_check_branch
          %180 = sbr.rel (%p178) target = $region40
        $region39: #{tpu_custom_call.1} parent=23 // pred_region
          %182 = vsyncadd [#allocation7], 0
          %s184 = sshll.u32 %s2, 4
          %s185 = int_to_ptr.hbm [resolvable:$true] %s184
          %187 = dma.smem_to_hbm [#allocation8], 16, %s185, [#allocation7]
        $region40: #{tpu_custom_call.1} parent=23 // pred_fallthru
          _
        // Predicated region
        $region41: #{tpu_custom_call.1} parent=23 // pred_check
          %p188 = pneg %p64
        $region42: #{tpu_custom_call.1} parent=23 // pred_check_branch
          %190 = sbr.rel (%p188) target = $region44
        $region43: #{tpu_custom_call.1} parent=23 // pred_region
          %192 = dma.done [#allocation7], 16
        $region44: #{tpu_custom_call.1} parent=23 // pred_fallthru
          _
        %193 = sfence
      $region24: #{tpu_custom_call.1} parent=5 // pred_fallthru
        _
      %p194 = scmp.le.s32.totalorder 2, %s20
      // Predicated region
      $region45: #{tpu_custom_call.1} parent=5 // pred_check
        %p195 = pneg %p194
      $region46: #{tpu_custom_call.1} parent=5 // pred_check_branch
        %197 = sbr.rel (%p195) target = $region48
      $region47: #{tpu_custom_call.1} parent=5 // pred_region
        %s198 = ssub.s32 %s20, 2
      $region48: #{tpu_custom_call.1} parent=5 // pred_fallthru
        _
    $region6: #{tpu_custom_call.1} parent=1 // loop_footer
      %s24 = sadd.s32 1, %s20
    $region7: #{tpu_custom_call.1} parent=1 // loop_footer_branch
      %19 = sbr.rel target = $region3
    $region8: #{tpu_custom_call.1} parent=1 // loop_exit
      _
    %199 = vsyncpa [#allocation6], 1
    %s200 = scalar_lea.sflag [#allocation6], 1
    %201 = vsyncpa %s200, 1
    %202 = vsyncpa [#allocation7], 1
    %s203 = scalar_lea.sflag [#allocation7], 1
    %204 = vsyncpa %s203, 1

</llo_original>
